<compile_context>
chip_gen: v6e
topology: v6e:2x2x1
jax: 0.10.0
libtpu: 0.0.40
codegen_flags: <defaults>
</compile_context>

<pallas_src>
import functools

import jax
import jax.numpy as jnp
from jax.experimental import pallas as pl
from jax.experimental.pallas import tpu as pltpu


def _locality_kernel(x_ref, vals_ref, argf_ref, *, chunk):
    """Per-(batch-block, lane-tile) kernel.

    x_ref    : (Bb, F, T) input block (native dtype)
    vals_ref : (Bb, 1, T) float32 — max over the feature axis
    argf_ref : (Bb, 1, T) int32   — argmax feature (first hit on ties)
    """
    Bb, F, T = x_ref.shape

    # Static lane chunking: large per-step DMA, small vreg working set.
    offs = []
    o = 0
    while o < T:
        c = min(chunk, T - o)
        offs.append((o, c))
        o += c

    # Feature iota, built once per chunk width (trace-time memoization, so it
    # is NOT re-broadcast inside the loops).
    iotas = {}

    def fio(c):
        if c not in iotas:
            iotas[c] = jax.lax.broadcasted_iota(jnp.int32, (F, c), 0)
        return iotas[c]

    for b in range(Bb):                                   # static & small
        for (lo, c) in offs:                              # static unroll
            sl = pl.ds(lo, c)
            xc = x_ref[b, :, sl]                          # (F, c), native dtype
            m = jnp.max(xc, axis=0, keepdims=True)        # (1, c) XLU sublane reduce
            hit = xc == m                                 # (F, c)
            arg = jnp.min(jnp.where(hit, fio(c), F),      # first max on ties
                          axis=0, keepdims=True)          # (1, c) int32
            vals_ref[b, :, sl] = m.astype(vals_ref.dtype)
            argf_ref[b, :, sl] = arg


def _pick_lane_tile(hw, cap):
    """Largest multiple of 128 that divides hw and is <= cap; else full hw."""
    if hw % 128 != 0:
        return hw                                         # full-extent block is always legal
    t = max(128, (min(hw, cap) // 128) * 128)
    while hw % t:
        t -= 128
    return t


def _largest_divisor_leq(n, cap):
    best = 1
    for d in range(1, n + 1):
        if n % d == 0 and d <= cap:
            best = d
    return best


def locality_convertor(x, *, lane_tile_cap=8192, chunk=1024,
                       target_block_bytes=1 << 20):
    """x: (B, F, H, W), NCHW like the PyTorch module. Returns (B, H*W, 4) f32."""
    B, F, H, W = x.shape
    HW = H * W
    # No wrapper-side dtype cast: bf16/fp8 inputs stream at native width.
    xr = x.reshape(B, F, HW)
    esize = jnp.dtype(x.dtype).itemsize

    T = _pick_lane_tile(HW, lane_tile_cap)
    # Fold batch into the block so the per-step DMA (~Bb*F*T*esize) amortizes
    # the fixed per-grid-step pipeline overhead.
    row_bytes = F * T * esize
    Bb = _largest_divisor_leq(B, max(1, target_block_bytes // max(row_bytes, 1)))

    # v7x has two TensorCores: keep at least 2 grid points when possible.
    if B // Bb == 1 and HW // T == 1:
        if B > 1:
            Bb = _largest_divisor_leq(B, max(1, B // 2))
        elif T % 256 == 0:
            T //= 2

    grid = (B // Bb, HW // T)
    kernel = functools.partial(_locality_kernel, chunk=min(chunk, T))

    vals, argf = pl.pallas_call(
        kernel,
        out_shape=(
            jax.ShapeDtypeStruct((B, 1, HW), jnp.float32),   # feature max
            jax.ShapeDtypeStruct((B, 1, HW), jnp.int32),     # argmax feature (exact)
        ),
        grid_spec=pltpu.PrefetchScalarGridSpec(
            num_scalar_prefetch=0,
            grid=grid,
            in_specs=[pl.BlockSpec((Bb, F, T), lambda bi, ti: (bi, 0, ti))],
            out_specs=(
                pl.BlockSpec((Bb, 1, T), lambda bi, ti: (bi, 0, ti)),
                pl.BlockSpec((Bb, 1, T), lambda bi, ti: (bi, 0, ti)),
            ),
        ),
        compiler_params=pltpu.CompilerParams(
            # Both grid axes are independent -> shard across TensorCores.
            dimension_semantics=("parallel", "parallel"),
            # Per-step blocks are <= ~1 MiB double-buffered; 32 MiB is safe on
            # v5e/v6e (128 MiB physical) and v7x (64 MiB physical).
            vmem_limit_bytes=32 * 1024 * 1024,
        ),
    )(xr)

    # --- post-kernel glue (plain JAX / XLA) ---------------------------------
    # Single multi-operand key-value sort: vals is the key, argf and the
    # spatial iota ride along, replacing argsort + gather + transpose.
    vals2 = vals.reshape(B, HW)
    argf2 = argf.reshape(B, HW)
    sp = jnp.broadcast_to(jnp.arange(HW, dtype=jnp.int32)[None, :], (B, HW))
    v_s, f_s, sp_s = jax.lax.sort((vals2, argf2, sp), dimension=1,
                                  is_stable=True, num_keys=1)
    nh = sp_s // W
    nw = sp_s - nh * W
    idx = f_s * HW + sp_s          # exact int32; f32 only in the final output
    # NOTE: the f32 output column loses index exactness once F*H*W > 2**24.
    return jnp.stack([v_s,
                      idx.astype(jnp.float32),
                      nh.astype(jnp.float32),
                      nw.astype(jnp.float32)], axis=-1)   # (B, HW, 4)


if __name__ == "__main__":
    key = jax.random.PRNGKey(0)
    B, F, H, W = 2, 4, 16, 16                              # nfeatures == F == 4
    x = jax.random.normal(key, (B, F, H, W), dtype=jnp.float32)

    out = locality_convertor(x)
    jax.block_until_ready(out)

    # sanity check against a pure-JAX reference
    HW = H * W
    ref_vals = jnp.max(x, axis=1).reshape(B, HW)
    ref_arg = jnp.argmax(x, axis=1).reshape(B, HW)
    sp = jnp.arange(HW, dtype=jnp.int32)
    ref = jnp.stack(
        [ref_vals,
         (ref_arg * HW + sp[None, :]).astype(jnp.float32),
         jnp.broadcast_to(sp // W, (B, HW)).astype(jnp.float32),
         jnp.broadcast_to(sp % W, (B, HW)).astype(jnp.float32)], axis=-1)
    order = jnp.argsort(ref[:, :, 0], axis=1)
    ref_sorted = jnp.take_along_axis(ref, order[:, :, None], axis=1)

    assert out.shape == (B, HW, 4)
    assert jnp.allclose(out, ref_sorted, atol=1e-5)
    print("KERNEL_OK")
</pallas_src>

<mosaic_0001>
module attributes {stable_mosaic.version = 11 : i64} {
  func.func @_locality_kernel(%arg0: i32, %arg1: i32, %arg2: memref<1x4x256xf32, #tpu.memory_space<vmem>>, %arg3: memref<1x1x256xf32, #tpu.memory_space<vmem>>, %arg4: memref<1x1x256xi32, #tpu.memory_space<vmem>>) attributes {dimension_semantics = [#tpu.dimension_semantics<parallel>, #tpu.dimension_semantics<parallel>], iteration_bounds = array<i64: 2, 1>, scalar_prefetch = 0 : i64, scratch_operands = 0 : i64, tpu.core_type = #tpu.core_type<tc>, window_params = [{transform_indices = @transform_0, window_bounds = array<i64: 1, 4, 256>}, {transform_indices = @transform_1, window_bounds = array<i64: 1, 1, 256>}, {transform_indices = @transform_2, window_bounds = array<i64: 1, 1, 256>}]} {
    %c0 = arith.constant 0 : index
    %c0_0 = arith.constant 0 : index
    %c0_1 = arith.constant 0 : index
    %0 = vector.load %arg2[%c0, %c0_0, %c0_1] : memref<1x4x256xf32, #tpu.memory_space<vmem>>, vector<1x4x256xf32>
    %1 = vector.shape_cast %0 : vector<1x4x256xf32> to vector<4x256xf32>
    %cst = arith.constant dense<0xFF800000> : vector<256xf32>
    %2 = vector.multi_reduction <maximumf>, %1, %cst [0] : vector<4x256xf32> to vector<256xf32>
    %3 = vector.shape_cast %2 : vector<256xf32> to vector<1x256xf32>
    %4 = vector.broadcast %3 : vector<1x256xf32> to vector<4x256xf32>
    %5 = arith.cmpf oeq, %1, %4 : vector<4x256xf32>
    %6 = tpu.iota {dimensions = array<i32: 0>} : vector<4x256xi32>
    %c4_i32 = arith.constant 4 : i32
    %7 = vector.broadcast %c4_i32 : i32 to vector<4x256xi32>
    %8 = arith.select %5, %6, %7 : vector<4x256xi1>, vector<4x256xi32>
    %cst_2 = arith.constant dense<2147483647> : vector<256xi32>
    %9 = vector.multi_reduction <minsi>, %8, %cst_2 [0] : vector<4x256xi32> to vector<256xi32>
    %10 = vector.shape_cast %9 : vector<256xi32> to vector<1x256xi32>
    %c0_3 = arith.constant 0 : index
    %c0_4 = arith.constant 0 : index
    %c0_5 = arith.constant 0 : index
    %11 = vector.load %arg3[%c0_3, %c0_4, %c0_5] : memref<1x1x256xf32, #tpu.memory_space<vmem>>, vector<1x1x256xf32>
    %12 = vector.shape_cast %11 : vector<1x1x256xf32> to vector<1x256xf32>
    %13 = vector.shape_cast %3 : vector<1x256xf32> to vector<1x1x256xf32>
    tpu.vector_store %arg3[%c0_3, %c0_4, %c0_5], %13 {strides = array<i32>} : memref<1x1x256xf32, #tpu.memory_space<vmem>>, vector<1x1x256xf32>,
    %c0_6 = arith.constant 0 : index
    %c0_7 = arith.constant 0 : index
    %c0_8 = arith.constant 0 : index
    %14 = vector.load %arg4[%c0_6, %c0_7, %c0_8] : memref<1x1x256xi32, #tpu.memory_space<vmem>>, vector<1x1x256xi32>
    %15 = vector.shape_cast %14 : vector<1x1x256xi32> to vector<1x256xi32>
    %16 = vector.shape_cast %10 : vector<1x256xi32> to vector<1x1x256xi32>
    tpu.vector_store %arg4[%c0_6, %c0_7, %c0_8], %16 {strides = array<i32>} : memref<1x1x256xi32, #tpu.memory_space<vmem>>, vector<1x1x256xi32>,
    return
  }
  func.func @transform_0(%arg0: i32, %arg1: i32) -> (i32, i32, i32) {
    %c0_i32 = arith.constant 0 : i32
    %c0_i32_0 = arith.constant 0 : i32
    return %arg0, %c0_i32, %arg1 : i32, i32, i32
  }
  func.func @transform_1(%arg0: i32, %arg1: i32) -> (i32, i32, i32) {
    %c0_i32 = arith.constant 0 : i32
    %c0_i32_0 = arith.constant 0 : i32
    return %arg0, %c0_i32, %arg1 : i32, i32, i32
  }
  func.func @transform_2(%arg0: i32, %arg1: i32) -> (i32, i32, i32) {
    %c0_i32 = arith.constant 0 : i32
    %c0_i32_0 = arith.constant 0 : i32
    return %arg0, %c0_i32, %arg1 : i32, i32, i32
  }
}

</mosaic_0001>

<llo_original>
// kernel: tpu_custom_call.1
$region0: #{tpu_custom_call.1}
  #allocation0 [shape = 'u32[]', space=smem, size = 0x4, offset = 0x4, fixed_abs, tag = 'smem constant byte address 0x4 - core index']
  #allocation1 [shape = 'u32[144,128]{1,0:T(1,128)}', space=vmem, size = 0x12000, scoped, tag = 'internal scratch']
  %s0 = inlined_call_operand.hbm [shape: f32[2,4,256], index: 0, kind: input, shape index: {}]
  %s1 = inlined_call_operand.hbm [shape: f32[2,1,256], index: 1, kind: output, shape index: {0}]
  %s2 = inlined_call_operand.hbm [shape: s32[2,1,256], index: 2, kind: output, shape index: {1}]
  %3 = xla_tuple %s1, %s2
  %s4 = sld [smem:[#allocation0]]
  $region49: #{tpu_custom_call.1} parent=0
    _
  %s6 = ssub.s32 1, %s4
  %s7 = scalar_select 0, %s6, %s4
  $region1: #{tpu_custom_call.1} parent=0
    #allocation2 [shape = 'u8[8192]{0}', space=vmem, size = 0x2000, scoped, tag = 'input window, operand 0']
    #allocation3 [shape = 's32[2]{0}', space=sflag, size = 0x8, scoped, tag = 'scoped memory for tpu_custom_call.1']
    #allocation4 [shape = 's32[2]{0}', space=sflag, size = 0x8, scoped, tag = 'scoped memory for tpu_custom_call.1']
    #allocation5 [shape = 'u8[2048]{0}', space=vmem, size = 0x800, scoped, tag = 'output window, operand 0']
    #allocation6 [shape = 'u8[2048]{0}', space=vmem, size = 0x800, scoped, tag = 'output window, operand 1']
    #allocation7 [shape = 's32[2]{0}', space=sflag, size = 0x8, scoped, tag = 'scoped memory for tpu_custom_call.1']
    %8 = vsyncpa [#allocation3], 0
    %s9 = scalar_lea.sflag [#allocation3], 1
    %10 = vsyncpa %s9, 0
    %11 = vsyncpa [#allocation4], 0
    %s12 = scalar_lea.sflag [#allocation4], 1
    %13 = vsyncpa %s12, 0
    %14 = vsyncpa [#allocation7], 0
    %s15 = scalar_lea.sflag [#allocation7], 1
    %16 = vsyncpa %s15, 0
    loop: start=0, step=1, limit=4
    $region2: #{tpu_custom_call.1} parent=1 // loop_pre_header
      _
    $region3: #{tpu_custom_call.1} parent=1 // loop_header
      %s18 = sphi 0, %s22
      %p19 = scmp.ge.s32.totalorder %s18, 4
      %s25 = sphi 0, %s37
      %s26 = sphi 0, %s33
      %s27 = sphi 0, %s25
      %s28 = sphi 0, %s26
      %s29 = sphi 0, %s27
      %s30 = sphi 0, %s28
      %s42 = sphi 0, %s44
      %s45 = sphi 0, %s42
      %s46 = sphi 0, %s45
      %s62 = sphi 0, %s46
      %s70 = sphi 0, %s72
      %s73 = sphi 0, %s70
      %s74 = sphi 0, %s73
      %s90 = sphi 0, %s74
      %s98 = sphi 0, %s100
      %s101 = sphi 0, %s98
      %s102 = sphi 0, %s101
      %s118 = sphi 0, %s102
    $region4: #{tpu_custom_call.1} parent=1 // loop_header_branch
      %21 = sbr.rel (%p19) target = $region8
    $region5: #{tpu_custom_call.1} parent=1 // loop_body
      %s23 = ssub.s32 %s18, 1
      %s24 = ssub.s32 %s18, 2
      %s31 = sadd.s32 1, %s26
      %p32 = scmp.ge.s32.totalorder %s31, 1
      %s33 = scalar_select %p32, 0, %s31
      %s34 = sadd.s32 1, %s25
      %s35 = scalar_select %p32, %s34, %s25
      %p36 = scmp.ge.s32.totalorder %s35, 2
      %s37 = scalar_select %p36, 0, %s35
      %s38 = ssub.s32 %s25, %s37
      %s39 = ssub.s32 %s26, %s33
      %s40 = sor.u32 %s38, %s39
      %p41 = scmp.eq.s32.totalorder %s40, 0
      %s43 = sadd.s32 %s42, 1
      %s44 = scalar_select %p41, %s42, %s43
      %p47 = pneg %p41
      %p48 = scmp.eq.s32.totalorder %s18, 1
      %p49 = por %p47, %p48
      %p50 = scmp.ne.s32.totalorder %s42, %s45
      %p51 = scmp.eq.s32.totalorder %s18, 0
      %p52 = por %p50, %p51
      %p53 = scmp.ne.s32.totalorder %s42, %s45
      %p54 = scmp.eq.s32.totalorder %s23, 1
      %p55 = por %p53, %p54
      %p56 = scmp.ne.s32.totalorder %s45, %s46
      %p57 = scmp.eq.s32.totalorder %s23, 0
      %p58 = por %p56, %p57
      %p59 = scmp.ne.s32.totalorder %s45, %s46
      %p60 = scmp.eq.s32.totalorder %s24, 1
      %p61 = por %p59, %p60
      %p63 = scmp.ne.s32.totalorder %s46, %s62
      %p64 = scmp.eq.s32.totalorder %s24, 0
      %p65 = por %p63, %p64
      %s66 = ssub.s32 %s25, %s37
      %s67 = ssub.s32 %s26, %s33
      %s68 = sor.u32 %s66, %s67
      %p69 = scmp.eq.s32.totalorder %s68, 0
      %s71 = sadd.s32 %s70, 1
      %s72 = scalar_select %p69, %s70, %s71
      %p75 = pneg %p69
      %p76 = scmp.eq.s32.totalorder %s18, 1
      %p77 = por %p75, %p76
      %p78 = scmp.ne.s32.totalorder %s70, %s73
      %p79 = scmp.eq.s32.totalorder %s18, 0
      %p80 = por %p78, %p79
      %p81 = scmp.ne.s32.totalorder %s70, %s73
      %p82 = scmp.eq.s32.totalorder %s23, 1
      %p83 = por %p81, %p82
      %p84 = scmp.ne.s32.totalorder %s73, %s74
      %p85 = scmp.eq.s32.totalorder %s23, 0
      %p86 = por %p84, %p85
      %p87 = scmp.ne.s32.totalorder %s73, %s74
      %p88 = scmp.eq.s32.totalorder %s24, 1
      %p89 = por %p87, %p88
      %p91 = scmp.ne.s32.totalorder %s74, %s90
      %p92 = scmp.eq.s32.totalorder %s24, 0
      %p93 = por %p91, %p92
      %s94 = ssub.s32 %s25, %s37
      %s95 = ssub.s32 %s26, %s33
      %s96 = sor.u32 %s94, %s95
      %p97 = scmp.eq.s32.totalorder %s96, 0
      %s99 = sadd.s32 %s98, 1
      %s100 = scalar_select %p97, %s98, %s99
      %p103 = pneg %p97
      %p104 = scmp.eq.s32.totalorder %s18, 1
      %p105 = por %p103, %p104
      %p106 = scmp.ne.s32.totalorder %s98, %s101
      %p107 = scmp.eq.s32.totalorder %s18, 0
      %p108 = por %p106, %p107
      %p109 = scmp.ne.s32.totalorder %s98, %s101
      %p110 = scmp.eq.s32.totalorder %s23, 1
      %p111 = por %p109, %p110
      %p112 = scmp.ne.s32.totalorder %s101, %s102
      %p113 = scmp.eq.s32.totalorder %s23, 0
      %p114 = por %p112, %p113
      %p115 = scmp.ne.s32.totalorder %s101, %s102
      %p116 = scmp.eq.s32.totalorder %s24, 1
      %p117 = por %p115, %p116
      %p119 = scmp.ne.s32.totalorder %s102, %s118
      %p120 = scmp.eq.s32.totalorder %s24, 0
      %p121 = por %p119, %p120
      %p122 = scmp.le.s32.totalorder 1, %s18
      %p123 = scmp.lt.s32.totalorder %s18, 3
      %p124 = pnand %p122, %p123
      %p125 = pneg %p124
      // Predicated region
      $region9: #{tpu_custom_call.1} parent=5 // pred_check
        _
      $region10: #{tpu_custom_call.1} parent=5 // pred_check_branch
        %127 = sbr.rel (%p124) target = $region12
      $region11: #{tpu_custom_call.1} parent=5 // pred_region
        %s128 = ssub.s32 %s18, 1
      $region12: #{tpu_custom_call.1} parent=5 // pred_fallthru
        _
      %p129 = scmp.lt.s32.totalorder %s18, 2
      // Predicated region
      $region13: #{tpu_custom_call.1} parent=5 // pred_check
        %p130 = pneg %p129
      $region14: #{tpu_custom_call.1} parent=5 // pred_check_branch
        %132 = sbr.rel (%p130) target = $region16
      $region15: #{tpu_custom_call.1} parent=5 // pred_region
        // Predicated region
        $region17: #{tpu_custom_call.1} parent=15 // pred_check
          %p133 = pneg %p52
        $region18: #{tpu_custom_call.1} parent=15 // pred_check_branch
          %135 = sbr.rel (%p133) target = $region20
        $region19: #{tpu_custom_call.1} parent=15 // pred_region
          %s136 = sand.u32 %s42, 1
          %s137 = scalar_lea.sflag [#allocation3], %s136
          %s138 = sand.u32 %s42, 1
          %s139 = smul.addr %s138, 8
          %s140 = scalar_lea.vmem [#allocation2], %s139
          %s141 = smul.u32 2, %s26
          %s143 = ssub.s32 128, 128
          %144 = vsyncadd %s137, %s143
          %s145 = smul.addr %s25, 2
          %s146 = sadd.s32 %s141, %s145
          %s147 = smul.addr %s146, 64
          %s148 = scalar_lea.hbm %s0, %s147
          %s150 = sshll.u32 %s140, 4
          %s151 = int_to_ptr.vmem [resolvable:$true] %s150
          %153 = dma.hbm_to_vmem [thread:$0]  %s148, 128, %s151, %s137
        $region20: #{tpu_custom_call.1} parent=15 // pred_fallthru
          _
      $region16: #{tpu_custom_call.1} parent=5 // pred_fallthru
        _
      %p154 = scmp.le.s32.totalorder 1, %s18
      %p155 = scmp.lt.s32.totalorder %s18, 3
      %p156 = pnand %p154, %p155
      %p157 = pneg %p156
      // Predicated region
      $region21: #{tpu_custom_call.1} parent=5 // pred_check
        _
      $region22: #{tpu_custom_call.1} parent=5 // pred_check_branch
        %159 = sbr.rel (%p156) target = $region24
      $region23: #{tpu_custom_call.1} parent=5 // pred_region
        %s160 = ssub.s32 %s18, 1
        %s161 = sand.u32 %s45, 1
        %s162 = scalar_lea.sflag [#allocation3], %s161
        %s163 = sand.u32 %s45, 1
        %s164 = smul.addr %s163, 8
        %s165 = scalar_lea.vmem [#allocation2], %s164
        // Predicated region
        $region25: #{tpu_custom_call.1} parent=23 // pred_check
          %p166 = pneg %p58
        $region26: #{tpu_custom_call.1} parent=23 // pred_check_branch
          %168 = sbr.rel (%p166) target = $region28
        $region27: #{tpu_custom_call.1} parent=23 // pred_region
          %169 = dma.done %s162, 128
        $region28: #{tpu_custom_call.1} parent=23 // pred_fallthru
          _
        %s170 = sand.u32 %s45, 1
        %s171 = scalar_lea.sflag [#allocation3], %s170
        %s172 = sand.u32 %s45, 1
        %s173 = smul.addr %s172, 8
        %s174 = scalar_lea.vmem [#allocation2], %s173
        %p175 = pneg %p58
        %p176 = pneg %p55
        %p177 = pneg %p86
        %p178 = pneg %p83
        %s179 = sand.u32 %s73, 1
        %s180 = scalar_lea.sflag [#allocation4], %s179
        %s181 = sand.u32 %s73, 1
        %s182 = smul.addr %s181, 2
        %s183 = scalar_lea.vmem [#allocation5], %s182
        %p184 = pneg %p114
        %p185 = pneg %p111
        %s186 = sand.u32 %s101, 1
        %s187 = scalar_lea.sflag [#allocation7], %s186
        %s188 = sand.u32 %s101, 1
        %s189 = smul.addr %s188, 2
        %s190 = scalar_lea.vmem [#allocation6], %s189
        %s191 = smul.u32 2, %s28
        %s192 = smul.u32 2, %s28
        %s193 = smul.u32 2, %s28
        %v194 = vld [vmem:[%s165] sm:$0xff]
        %v196 = vcombine.high %v194, %v194
        %vm198 = vcmask 1043456
        %v199 = vsel %vm198, %v194, -inf
        %v200 = vrot.slane %v199, 4
        %v201 = vmax.f32 %v199, %v200
        %v202 = vrot.slane %v201, 2
        %v203 = vmax.f32 %v201, %v202
        %v204 = vrot.slane %v203, 1
        %v205 = vmax.f32 %v203, %v204
        %v206 = vsel %vm198, %v196, -inf
        %v207 = vrot.slane %v206, 4
        %v208 = vmax.f32 %v206, %v207
        %v209 = vrot.slane %v208, 2
        %v210 = vmax.f32 %v208, %v209
        %v211 = vrot.slane %v210, 1
        %v212 = vmax.f32 %v210, %v211
        %v215 = vcombine.low %v205, %v212
        %vm217 = vcmp.eq.f32.partialorder %v194, %v215
        %v218 = vlaneseq
        %v219 = vshrl.u32 %v218, 7
        %v221 = vunpack.c.l.s4 839922192
        %v222 = vunpack.c.0.s8 %v221
        %v223 = vlaneseq
        %v224 = vshrl.u32 %v223, 7
        %v225 = vsub.s32 %v222, %v224
        %v226 = vrot.slane %v219, %v225
        %v227 = vsel %vm217, %v226, 4
        %v228 = vcombine.high %v227, %v227
        %v229 = vsel %vm198, %v227, 2147483647
        %v230 = vrot.slane %v229, 4
        %vm231 = vcmp.lt.s32.totalorder %v229, %v230
        %v232 = vsel %vm231, %v229, %v230
        %v233 = vrot.slane %v232, 2
        %vm234 = vcmp.lt.s32.totalorder %v232, %v233
        %v235 = vsel %vm234, %v232, %v233
        %v236 = vrot.slane %v235, 1
        %vm237 = vcmp.lt.s32.totalorder %v235, %v236
        %v238 = vsel %vm237, %v235, %v236
        %v239 = vsel %vm198, %v228, 2147483647
        %v240 = vrot.slane %v239, 4
        %vm241 = vcmp.lt.s32.totalorder %v239, %v240
        %v242 = vsel %vm241, %v239, %v240
        %v243 = vrot.slane %v242, 2
        %vm244 = vcmp.lt.s32.totalorder %v242, %v243
        %v245 = vsel %vm244, %v242, %v243
        %v246 = vrot.slane %v245, 1
        %vm247 = vcmp.lt.s32.totalorder %v245, %v246
        %v248 = vsel %vm247, %v245, %v246
        %v250 = vunpack.c.l.s4 1966171168
        %v251 = vunpack.c.0.s8 %v250
        %v252 = vlaneseq
        %v253 = vshrl.u32 %v252, 7
        %v254 = vsub.s32 %v251, %v253
        %v255 = vrot.slane %v215, %v254
        %v257 = vunpack.c.l.s4 1966171168
        %v258 = vunpack.c.0.s8 %v257
        %v259 = vlaneseq
        %v260 = vshrl.u32 %v259, 7
        %v261 = vsub.s32 %v258, %v260
        %v262 = vrot.slane %v255, %v261
        %v264 = vlaneseq
        %vm265 = vcmp.ge.s32.totalorder %v264, 0
        %vm266 = vcmp.lt.s32.totalorder %v264, 256
        %vm267 = vmand %vm265, %vm266
        %268 = vst.msk [vmem:[%s183] sm:$0x3] %vm267, %v262
        %v269 = vcombine.low %v238, %v248
        %v271 = vunpack.c.l.s4 1966171168
        %v272 = vunpack.c.0.s8 %v271
        %v273 = vlaneseq
        %v274 = vshrl.u32 %v273, 7
        %v275 = vsub.s32 %v272, %v274
        %v276 = vrot.slane %v269, %v275
        %v278 = vunpack.c.l.s4 1966171168
        %v279 = vunpack.c.0.s8 %v278
        %v280 = vlaneseq
        %v281 = vshrl.u32 %v280, 7
        %v282 = vsub.s32 %v279, %v281
        %v283 = vrot.slane %v276, %v282
        %284 = vst.msk [vmem:[%s190] sm:$0x3] %vm267, %v283
        %s285 = sand.u32 %s73, 1
        %s286 = scalar_lea.sflag [#allocation4], %s285
        %s287 = sand.u32 %s73, 1
        %s288 = smul.addr %s287, 2
        %s289 = scalar_lea.vmem [#allocation5], %s288
        %s290 = sand.u32 %s101, 1
        %s291 = scalar_lea.sflag [#allocation7], %s290
        %s292 = sand.u32 %s101, 1
        %s293 = smul.addr %s292, 2
        %s294 = scalar_lea.vmem [#allocation6], %s293
        // Predicated region
        $region29: #{tpu_custom_call.1} parent=23 // pred_check
          %p295 = pneg %p83
        $region30: #{tpu_custom_call.1} parent=23 // pred_check_branch
          %297 = sbr.rel (%p295) target = $region32
        $region31: #{tpu_custom_call.1} parent=23 // pred_region
          %s298 = smul.u32 2, %s28
          %s300 = ssub.s32 32, 32
          %301 = vsyncadd %s286, %s300
          %s302 = smul.addr %s27, 2
          %s303 = sadd.s32 %s298, %s302
          %s304 = smul.addr %s303, 16
          %s305 = scalar_lea.hbm %s1, %s304
          %s307 = sshll.u32 %s289, 4
          %s308 = int_to_ptr.vmem [resolvable:$true] %s307
          %310 = dma.vmem_to_hbm [thread:$0]  %s308, 32, %s305, %s286
        $region32: #{tpu_custom_call.1} parent=23 // pred_fallthru
          _
        // Predicated region
        $region33: #{tpu_custom_call.1} parent=23 // pred_check
          %p311 = pneg %p111
        $region34: #{tpu_custom_call.1} parent=23 // pred_check_branch
          %313 = sbr.rel (%p311) target = $region36
        $region35: #{tpu_custom_call.1} parent=23 // pred_region
          %s314 = smul.u32 2, %s28
          %s316 = ssub.s32 32, 32
          %317 = vsyncadd %s291, %s316
          %s318 = smul.addr %s27, 2
          %s319 = sadd.s32 %s314, %s318
          %s320 = smul.addr %s319, 16
          %s321 = scalar_lea.hbm %s2, %s320
          %s323 = sshll.u32 %s294, 4
          %s324 = int_to_ptr.vmem [resolvable:$true] %s323
          %326 = dma.vmem_to_hbm [thread:$0]  %s324, 32, %s321, %s291
        $region36: #{tpu_custom_call.1} parent=23 // pred_fallthru
          _
      $region24: #{tpu_custom_call.1} parent=5 // pred_fallthru
        _
      %p327 = scmp.le.s32.totalorder 2, %s18
      // Predicated region
      $region37: #{tpu_custom_call.1} parent=5 // pred_check
        %p328 = pneg %p327
      $region38: #{tpu_custom_call.1} parent=5 // pred_check_branch
        %330 = sbr.rel (%p328) target = $region40
      $region39: #{tpu_custom_call.1} parent=5 // pred_region
        %s331 = ssub.s32 %s18, 2
        // Predicated region
        $region41: #{tpu_custom_call.1} parent=39 // pred_check
          %p332 = pneg %p89
        $region42: #{tpu_custom_call.1} parent=39 // pred_check_branch
          %334 = sbr.rel (%p332) target = $region44
        $region43: #{tpu_custom_call.1} parent=39 // pred_region
          %s335 = sand.u32 %s74, 1
          %s336 = scalar_lea.sflag [#allocation4], %s335
          %s337 = sand.u32 %s74, 1
          %s338 = smul.addr %s337, 2
          %s339 = scalar_lea.vmem [#allocation5], %s338
          %340 = dma.done %s336, 32
        $region44: #{tpu_custom_call.1} parent=39 // pred_fallthru
          _
        // Predicated region
        $region45: #{tpu_custom_call.1} parent=39 // pred_check
          %p341 = pneg %p117
        $region46: #{tpu_custom_call.1} parent=39 // pred_check_branch
          %343 = sbr.rel (%p341) target = $region48
        $region47: #{tpu_custom_call.1} parent=39 // pred_region
          %s344 = sand.u32 %s102, 1
          %s345 = scalar_lea.sflag [#allocation7], %s344
          %s346 = sand.u32 %s102, 1
          %s347 = smul.addr %s346, 2
          %s348 = scalar_lea.vmem [#allocation6], %s347
          %349 = dma.done %s345, 32
        $region48: #{tpu_custom_call.1} parent=39 // pred_fallthru
          _
      $region40: #{tpu_custom_call.1} parent=5 // pred_fallthru
        _
    $region6: #{tpu_custom_call.1} parent=1 // loop_footer
      %s22 = sadd.s32 1, %s18
    $region7: #{tpu_custom_call.1} parent=1 // loop_footer_branch
      %17 = sbr.rel target = $region3
    $region8: #{tpu_custom_call.1} parent=1 // loop_exit
      _
    %350 = vsyncpa [#allocation3], 1
    %s351 = scalar_lea.sflag [#allocation3], 1
    %352 = vsyncpa %s351, 1
    %353 = vsyncpa [#allocation4], 1
    %s354 = scalar_lea.sflag [#allocation4], 1
    %355 = vsyncpa %s354, 1
    %356 = vsyncpa [#allocation7], 1
    %s357 = scalar_lea.sflag [#allocation7], 1
    %358 = vsyncpa %s357, 1

</llo_original>
